<compile_context>
chip_gen: v6e
topology: v6e:2x2x1
jax: 0.10.0
libtpu: 0.0.40
codegen_flags: <defaults>
</compile_context>

<pallas_src>
import jax
import jax.numpy as jnp
from jax.experimental import pallas as pl
from jax.experimental.pallas import tpu as pltpu


def _cdiv(a, b):
    return -(-a // b)


def _round_up(x, m):
    return _cdiv(x, m) * m


def _make_heads_kernel(num_classes, cls_pad):
    """Fused 1x1-conv classifier heads, pixel axis on lanes.

    x_ref    : (1, C, tpix)        FPN feature tile (NCHW orientation)
    w_ref    : (OUT_pad, C)        fused [w_sem (padded to cls_pad); w_vote]
    b_ref    : (OUT_pad, 1)        fused bias (f32)
    sem_ref  : (1, num_classes, tpix)
    vote_ref : (1, num_votes,   tpix)
    """
    def kernel(x_ref, w_ref, b_ref, sem_ref, vote_ref):
        x = x_ref[0]                                          # (C, tpix)
        acc = jnp.dot(w_ref[...], x,
                      preferred_element_type=jnp.float32)     # (OUT_pad, tpix)
        acc = acc + b_ref[...]                                # (OUT_pad,1) bcast
        sem_ref[0] = acc[:num_classes].astype(sem_ref.dtype)  # starts at row 0
        vote_ref[0] = acc[cls_pad:].astype(vote_ref.dtype)    # 8-row aligned
    return kernel


# ~24 MiB for double-buffered input+output tiles; fits under the explicit
# 48 MiB scoped-VMEM limit on every generation (v7x physical = 64 MiB).
_VMEM_TILE_BUDGET = 24 * 1024 * 1024
_VMEM_LIMIT_BYTES = 48 * 1024 * 1024


def _choose_pixel_tile(hw, c, out_pad, x_itemsize, out_itemsize, target):
    """Fixed pixel tile (multiple of 128), sized against the VMEM budget."""
    if hw <= 128:
        return hw                      # full-dim block is always legal
    # bytes/pixel of double-buffered x tile + double-buffered output tiles
    per_pixel = 2 * (c * x_itemsize + out_pad * out_itemsize)
    cap = max(128, (_VMEM_TILE_BUDGET // per_pixel) // 128 * 128)
    return int(min(target, cap, _round_up(hw, 128)))


def net_forward(x_nchw, params, *, pixel_tile_target=8192):
    """Post-FPN Net forward: two fused 1x1-conv classifier heads.

    x_nchw: (N, FPN_C, H, W) — FPN output features (f32 or bf16).
    Returns (sem_pred, vote_pred) in NCHW, matching PyTorch Conv2d semantics.
    """
    w_sem, b_sem = params["w_sem"], params["b_sem"]       # (cls,C), (cls,)
    w_vote, b_vote = params["w_vote"], params["b_vote"]   # (vote,C), (vote,)
    N, C, H, W = x_nchw.shape
    num_classes = w_sem.shape[0]
    num_votes = w_vote.shape[0]

    # Pad the sem head to a multiple of 8 rows so the vote half of the fused
    # accumulator starts on an f32 sublane boundary (pad rows never stored).
    cls_pad = _round_up(num_classes, 8)
    out_pad = cls_pad + num_votes

    HW = H * W
    out_dtype = x_nchw.dtype
    tpix = _choose_pixel_tile(HW, C, out_pad,
                              jnp.dtype(x_nchw.dtype).itemsize,
                              jnp.dtype(out_dtype).itemsize,
                              pixel_tile_target)
    n_tiles = _cdiv(HW, tpix)
    # v7x has 2 TensorCores: avoid a 1-step grid when it is cheap to split.
    if N * n_tiles < 2 and HW >= 256:
        tpix = max(128, _round_up(_cdiv(HW, 2), 128))
        n_tiles = _cdiv(HW, tpix)
    grid = (N, n_tiles)

    # Free (contiguous) reshape — no transpose, no extra HBM pass.
    x3 = x_nchw.reshape(N, C, HW)

    # Fuse the two heads' weights/biases (tiny tensors). Weights follow the
    # feature dtype (bf16 features -> bf16 MXU operands); bias stays f32 and
    # is added to the f32 accumulator.
    w_all = jnp.concatenate(
        [w_sem, jnp.zeros((cls_pad - num_classes, C), w_sem.dtype), w_vote],
        axis=0).astype(x_nchw.dtype)                                 # (OUT_pad, C)
    b_all = jnp.concatenate(
        [b_sem, jnp.zeros((cls_pad - num_classes,), b_sem.dtype), b_vote],
        axis=0).astype(jnp.float32).reshape(out_pad, 1)

    cost = pl.CostEstimate(
        flops=2 * N * HW * C * (num_classes + num_votes),
        transcendentals=0,
        bytes_accessed=(N * HW * (C * jnp.dtype(x_nchw.dtype).itemsize
                                  + (num_classes + num_votes)
                                  * jnp.dtype(out_dtype).itemsize)
                        + out_pad * (C + 1) * 4),
    )

    sem3, vote3 = pl.pallas_call(
        _make_heads_kernel(num_classes, cls_pad),
        out_shape=(
            jax.ShapeDtypeStruct((N, num_classes, HW), out_dtype),
            jax.ShapeDtypeStruct((N, num_votes, HW), out_dtype),
        ),
        grid=grid,
        in_specs=[
            pl.BlockSpec((1, C, tpix), lambda b, p: (b, 0, p)),
            pl.BlockSpec((out_pad, C), lambda b, p: (0, 0)),
            pl.BlockSpec((out_pad, 1), lambda b, p: (0, 0)),
        ],
        out_specs=(
            pl.BlockSpec((1, num_classes, tpix), lambda b, p: (b, 0, p)),
            pl.BlockSpec((1, num_votes, tpix), lambda b, p: (b, 0, p)),
        ),
        compiler_params=pltpu.CompilerParams(
            dimension_semantics=("parallel", "parallel"),
            vmem_limit_bytes=_VMEM_LIMIT_BYTES),
        cost_estimate=cost,
    )(x3, w_all, b_all)

    sem_pred = sem3.reshape(N, num_classes, H, W)
    vote_pred = vote3.reshape(N, num_votes, H, W)
    return sem_pred, vote_pred


def init_params(key, fpn_c, num_classes, num_votes):
    """Deterministic synthetic init for the 1x1 conv heads.

    PyTorch Conv2d(FPN_C, out, 1) weight has shape (out, FPN_C, 1, 1); here it
    is stored as the (out, FPN_C) matrix used directly by the kernel.
    """
    k1, k2, k3, k4 = jax.random.split(key, 4)
    bound = 1.0 / (float(fpn_c) ** 0.5)
    w_sem = jax.random.uniform(k1, (num_classes, fpn_c), jnp.float32,
                               -bound, bound)
    b_sem = jax.random.uniform(k2, (num_classes,), jnp.float32, -bound, bound)
    w_vote = jax.random.uniform(k3, (num_votes, fpn_c), jnp.float32,
                                -bound, bound)
    b_vote = jax.random.uniform(k4, (num_votes,), jnp.float32, -bound, bound)
    return {"w_sem": w_sem, "b_sem": b_sem,
            "w_vote": w_vote, "b_vote": b_vote}


def _reference(x, params):
    sem = (jnp.einsum("nchw,oc->nohw", x.astype(jnp.float32),
                      params["w_sem"]) + params["b_sem"][None, :, None, None])
    vote = (jnp.einsum("nchw,oc->nohw", x.astype(jnp.float32),
                       params["w_vote"]) + params["b_vote"][None, :, None, None])
    return sem, vote


if __name__ == "__main__":
    key = jax.random.PRNGKey(0)

    # --- Test 1: f32, aligned class count, divisible spatial extent. ------
    N, FPN_C, H, W = 2, 32, 16, 16
    num_classes, num_votes = 8, 16
    k_x, k_p, key = jax.random.split(key, 3)
    x = jax.random.normal(k_x, (N, FPN_C, H, W), jnp.float32)
    params = init_params(k_p, FPN_C, num_classes, num_votes)

    sem_pred, vote_pred = net_forward(x, params)
    jax.block_until_ready((sem_pred, vote_pred))
    sem_ref, vote_ref = _reference(x, params)
    assert sem_pred.shape == (N, num_classes, H, W)
    assert vote_pred.shape == (N, num_votes, H, W)
    assert jnp.allclose(sem_pred, sem_ref, atol=1e-4, rtol=1e-4)
    assert jnp.allclose(vote_pred, vote_ref, atol=1e-4, rtol=1e-4)

    # --- Test 2: cdiv grid with masked partial last block + unaligned
    #             class count (exercises the padded accumulator split). -----
    N2, C2, H2, W2 = 1, 32, 20, 20          # HW=400, tpix forced to 128 -> 4 tiles
    cls2, votes2 = 5, 11
    k_x2, k_p2, key = jax.random.split(key, 3)
    x2 = jax.random.normal(k_x2, (N2, C2, H2, W2), jnp.float32)
    params2 = init_params(k_p2, C2, cls2, votes2)
    sem2, vote2 = net_forward(x2, params2, pixel_tile_target=128)
    jax.block_until_ready((sem2, vote2))
    sem2_ref, vote2_ref = _reference(x2, params2)
    assert jnp.allclose(sem2, sem2_ref, atol=1e-4, rtol=1e-4)
    assert jnp.allclose(vote2, vote2_ref, atol=1e-4, rtol=1e-4)

    # --- Test 3: bf16 feature path (half the HBM read stream). -------------
    x_bf = x.astype(jnp.bfloat16)
    sem_bf, vote_bf = net_forward(x_bf, params)
    jax.block_until_ready((sem_bf, vote_bf))
    sem_bref, vote_bref = _reference(x_bf, params)
    assert jnp.allclose(sem_bf.astype(jnp.float32), sem_bref,
                        atol=5e-2, rtol=5e-2)
    assert jnp.allclose(vote_bf.astype(jnp.float32), vote_bref,
                        atol=5e-2, rtol=5e-2)

    print("KERNEL_OK")
</pallas_src>

<mosaic_0001>
module attributes {stable_mosaic.version = 11 : i64} {
  func.func @kernel(%arg0: i32, %arg1: i32, %arg2: memref<1x32x256xf32, #tpu.memory_space<vmem>>, %arg3: memref<24x32xf32, #tpu.memory_space<vmem>>, %arg4: memref<24x1xf32, #tpu.memory_space<vmem>>, %arg5: memref<1x8x256xf32, #tpu.memory_space<vmem>>, %arg6: memref<1x16x256xf32, #tpu.memory_space<vmem>>) attributes {dimension_semantics = [#tpu.dimension_semantics<parallel>, #tpu.dimension_semantics<parallel>], iteration_bounds = array<i64: 2, 1>, scalar_prefetch = 0 : i64, scratch_operands = 0 : i64, tpu.core_type = #tpu.core_type<tc>, window_params = [{transform_indices = @transform_0, window_bounds = array<i64: 1, 32, 256>}, {pipeline_mode = #tpu.pipeline_mode<synchronous>, transform_indices = @transform_1, window_bounds = array<i64: 24, 32>}, {pipeline_mode = #tpu.pipeline_mode<synchronous>, transform_indices = @transform_2, window_bounds = array<i64: 24, 1>}, {transform_indices = @transform_3, window_bounds = array<i64: 1, 8, 256>}, {transform_indices = @transform_4, window_bounds = array<i64: 1, 16, 256>}]} {
    %c0 = arith.constant 0 : index
    %c0_0 = arith.constant 0 : index
    %c0_1 = arith.constant 0 : index
    %0 = vector.load %arg2[%c0, %c0_0, %c0_1] : memref<1x32x256xf32, #tpu.memory_space<vmem>>, vector<1x32x256xf32>
    %1 = vector.shape_cast %0 : vector<1x32x256xf32> to vector<32x256xf32>
    %c0_2 = arith.constant 0 : index
    %c0_3 = arith.constant 0 : index
    %2 = vector.load %arg3[%c0_2, %c0_3] : memref<24x32xf32, #tpu.memory_space<vmem>>, vector<24x32xf32>
    %cst = arith.constant dense<0.000000e+00> : vector<24x256xf32>
    %3 = tpu.matmul %2, %1, %cst {dimension_numbers = #tpu.dot_dimension_numbers<[1], [0], [0], [1], [0, 0, 1, 1], [], []>} : vector<24x32xf32>, vector<32x256xf32>, vector<24x256xf32> -> vector<24x256xf32>
    %c0_4 = arith.constant 0 : index
    %c0_5 = arith.constant 0 : index
    %4 = vector.load %arg4[%c0_4, %c0_5] : memref<24x1xf32, #tpu.memory_space<vmem>>, vector<24x1xf32>
    %5 = vector.broadcast %4 : vector<24x1xf32> to vector<24x256xf32>
    %6 = arith.addf %3, %5 : vector<24x256xf32>
    %7 = vector.extract_strided_slice %6 {offsets = [0, 0], sizes = [8, 256], strides = [1, 1]} : vector<24x256xf32> to vector<8x256xf32>
    %c0_6 = arith.constant 0 : index
    %c0_7 = arith.constant 0 : index
    %c0_8 = arith.constant 0 : index
    %8 = vector.load %arg5[%c0_6, %c0_7, %c0_8] : memref<1x8x256xf32, #tpu.memory_space<vmem>>, vector<1x8x256xf32>
    %9 = vector.shape_cast %8 : vector<1x8x256xf32> to vector<8x256xf32>
    %10 = vector.shape_cast %7 : vector<8x256xf32> to vector<1x8x256xf32>
    tpu.vector_store %arg5[%c0_6, %c0_7, %c0_8], %10 {strides = array<i32>} : memref<1x8x256xf32, #tpu.memory_space<vmem>>, vector<1x8x256xf32>,
    %11 = vector.extract_strided_slice %6 {offsets = [8, 0], sizes = [16, 256], strides = [1, 1]} : vector<24x256xf32> to vector<16x256xf32>
    %c0_9 = arith.constant 0 : index
    %c0_10 = arith.constant 0 : index
    %c0_11 = arith.constant 0 : index
    %12 = vector.load %arg6[%c0_9, %c0_10, %c0_11] : memref<1x16x256xf32, #tpu.memory_space<vmem>>, vector<1x16x256xf32>
    %13 = vector.shape_cast %12 : vector<1x16x256xf32> to vector<16x256xf32>
    %14 = vector.shape_cast %11 : vector<16x256xf32> to vector<1x16x256xf32>
    tpu.vector_store %arg6[%c0_9, %c0_10, %c0_11], %14 {strides = array<i32>} : memref<1x16x256xf32, #tpu.memory_space<vmem>>, vector<1x16x256xf32>,
    return
  }
  func.func @transform_0(%arg0: i32, %arg1: i32) -> (i32, i32, i32) {
    %c0_i32 = arith.constant 0 : i32
    %c0_i32_0 = arith.constant 0 : i32
    return %arg0, %c0_i32, %arg1 : i32, i32, i32
  }
  func.func @transform_1(%arg0: i32, %arg1: i32) -> (i32, i32) {
    %c0_i32 = arith.constant 0 : i32
    %c0_i32_0 = arith.constant 0 : i32
    %c0_i32_1 = arith.constant 0 : i32
    return %c0_i32, %c0_i32_0 : i32, i32
  }
  func.func @transform_2(%arg0: i32, %arg1: i32) -> (i32, i32) {
    %c0_i32 = arith.constant 0 : i32
    %c0_i32_0 = arith.constant 0 : i32
    %c0_i32_1 = arith.constant 0 : i32
    return %c0_i32, %c0_i32_0 : i32, i32
  }
  func.func @transform_3(%arg0: i32, %arg1: i32) -> (i32, i32, i32) {
    %c0_i32 = arith.constant 0 : i32
    %c0_i32_0 = arith.constant 0 : i32
    return %arg0, %c0_i32, %arg1 : i32, i32, i32
  }
  func.func @transform_4(%arg0: i32, %arg1: i32) -> (i32, i32, i32) {
    %c0_i32 = arith.constant 0 : i32
    %c0_i32_0 = arith.constant 0 : i32
    return %arg0, %c0_i32, %arg1 : i32, i32, i32
  }
}

</mosaic_0001>

<llo_original>
// kernel: tpu_custom_call.1
$region0: #{tpu_custom_call.1}
  #allocation0 [shape = 'u32[]', space=smem, size = 0x4, offset = 0x4, fixed_abs, tag = 'smem constant byte address 0x4 - core index']
  #allocation1 [shape = 'u32[144,128]{1,0:T(1,128)}', space=vmem, size = 0x12000, scoped, tag = 'internal scratch']
  %s0 = inlined_call_operand.hbm [shape: f32[2,32,256], index: 0, kind: input, shape index: {}]
  %s1 = inlined_call_operand.vmem [shape: f32[24,32], index: 1, kind: input, shape index: {}]
  %s2 = inlined_call_operand.vmem [shape: f32[24,1], index: 2, kind: input, shape index: {}]
  %s3 = inlined_call_operand.hbm [shape: f32[2,8,256], index: 3, kind: output, shape index: {0}]
  %s4 = inlined_call_operand.hbm [shape: f32[2,16,256], index: 4, kind: output, shape index: {1}]
  %5 = xla_tuple %s3, %s4
  %s6 = sld [smem:[#allocation0]]
  $region57: #{tpu_custom_call.1} parent=0
    _
  %s8 = ssub.s32 1, %s6
  %s9 = scalar_select 0, %s8, %s6
  $region1: #{tpu_custom_call.1} parent=0
    #allocation2 [shape = 'u8[65536]{0}', space=vmem, size = 0x10000, scoped, tag = 'input window, operand 0']
    #allocation3 [shape = 's32[2]{0}', space=sflag, size = 0x8, scoped, tag = 'scoped memory for tpu_custom_call.1']
    #allocation4 [shape = 's32[2]{0}', space=sflag, size = 0x8, scoped, tag = 'scoped memory for tpu_custom_call.1']
    #allocation5 [shape = 'u8[16384]{0}', space=vmem, size = 0x4000, scoped, tag = 'output window, operand 0']
    #allocation6 [shape = 'u8[32768]{0}', space=vmem, size = 0x8000, scoped, tag = 'output window, operand 1']
    #allocation7 [shape = 's32[2]{0}', space=sflag, size = 0x8, scoped, tag = 'scoped memory for tpu_custom_call.1']
    %10 = vsyncpa [#allocation3], 0
    %s11 = scalar_lea.sflag [#allocation3], 1
    %12 = vsyncpa %s11, 0
    %13 = vsyncpa [#allocation4], 0
    %s14 = scalar_lea.sflag [#allocation4], 1
    %15 = vsyncpa %s14, 0
    %16 = vsyncpa [#allocation7], 0
    %s17 = scalar_lea.sflag [#allocation7], 1
    %18 = vsyncpa %s17, 0
    loop: start=0, step=1, limit=4
    $region2: #{tpu_custom_call.1} parent=1 // loop_pre_header
      _
    $region3: #{tpu_custom_call.1} parent=1 // loop_header
      %s20 = sphi 0, %s24
      %p21 = scmp.ge.s32.totalorder %s20, 4
      %s27 = sphi 0, %s39
      %s28 = sphi 0, %s35
      %s29 = sphi 0, %s27
      %s30 = sphi 0, %s28
      %s31 = sphi 0, %s29
      %s32 = sphi 0, %s30
      %s44 = sphi 0, %s46
      %s47 = sphi 0, %s44
      %s48 = sphi 0, %s47
      %s64 = sphi 0, %s48
      %s68 = sphi 0, %s68
      %s70 = sphi 0, %s68
      %s71 = sphi 0, %s70
      %s85 = sphi 0, %s71
      %s89 = sphi 0, %s89
      %s91 = sphi 0, %s89
      %s92 = sphi 0, %s91
      %s106 = sphi 0, %s92
      %s114 = sphi 0, %s116
      %s117 = sphi 0, %s114
      %s118 = sphi 0, %s117
      %s134 = sphi 0, %s118
      %s142 = sphi 0, %s144
      %s145 = sphi 0, %s142
      %s146 = sphi 0, %s145
      %s162 = sphi 0, %s146
    $region4: #{tpu_custom_call.1} parent=1 // loop_header_branch
      %23 = sbr.rel (%p21) target = $region8
    $region5: #{tpu_custom_call.1} parent=1 // loop_body
      %s25 = ssub.s32 %s20, 1
      %s26 = ssub.s32 %s20, 2
      %s33 = sadd.s32 1, %s28
      %p34 = scmp.ge.s32.totalorder %s33, 1
      %s35 = scalar_select %p34, 0, %s33
      %s36 = sadd.s32 1, %s27
      %s37 = scalar_select %p34, %s36, %s27
      %p38 = scmp.ge.s32.totalorder %s37, 2
      %s39 = scalar_select %p38, 0, %s37
      %s40 = ssub.s32 %s27, %s39
      %s41 = ssub.s32 %s28, %s35
      %s42 = sor.u32 %s40, %s41
      %p43 = scmp.eq.s32.totalorder %s42, 0
      %s45 = sadd.s32 %s44, 1
      %s46 = scalar_select %p43, %s44, %s45
      %p49 = pneg %p43
      %p50 = scmp.eq.s32.totalorder %s20, 1
      %p51 = por %p49, %p50
      %p52 = scmp.ne.s32.totalorder %s44, %s47
      %p53 = scmp.eq.s32.totalorder %s20, 0
      %p54 = por %p52, %p53
      %p55 = scmp.ne.s32.totalorder %s44, %s47
      %p56 = scmp.eq.s32.totalorder %s25, 1
      %p57 = por %p55, %p56
      %p58 = scmp.ne.s32.totalorder %s47, %s48
      %p59 = scmp.eq.s32.totalorder %s25, 0
      %p60 = por %p58, %p59
      %p61 = scmp.ne.s32.totalorder %s47, %s48
      %p62 = scmp.eq.s32.totalorder %s26, 1
      %p63 = por %p61, %p62
      %p65 = scmp.ne.s32.totalorder %s48, %s64
      %p66 = scmp.eq.s32.totalorder %s26, 0
      %p67 = por %p65, %p66
      %s69 = sadd.s32 %s68, 1
      %p72 = scmp.eq.s32.totalorder %s20, 1
      %p73 = scmp.ne.s32.totalorder %s68, %s70
      %p74 = scmp.eq.s32.totalorder %s20, 0
      %p75 = por %p73, %p74
      %p76 = scmp.ne.s32.totalorder %s68, %s70
      %p77 = scmp.eq.s32.totalorder %s25, 1
      %p78 = por %p76, %p77
      %p79 = scmp.ne.s32.totalorder %s70, %s71
      %p80 = scmp.eq.s32.totalorder %s25, 0
      %p81 = por %p79, %p80
      %p82 = scmp.ne.s32.totalorder %s70, %s71
      %p83 = scmp.eq.s32.totalorder %s26, 1
      %p84 = por %p82, %p83
      %p86 = scmp.ne.s32.totalorder %s71, %s85
      %p87 = scmp.eq.s32.totalorder %s26, 0
      %p88 = por %p86, %p87
      %s90 = sadd.s32 %s89, 1
      %p93 = scmp.eq.s32.totalorder %s20, 1
      %p94 = scmp.ne.s32.totalorder %s89, %s91
      %p95 = scmp.eq.s32.totalorder %s20, 0
      %p96 = por %p94, %p95
      %p97 = scmp.ne.s32.totalorder %s89, %s91
      %p98 = scmp.eq.s32.totalorder %s25, 1
      %p99 = por %p97, %p98
      %p100 = scmp.ne.s32.totalorder %s91, %s92
      %p101 = scmp.eq.s32.totalorder %s25, 0
      %p102 = por %p100, %p101
      %p103 = scmp.ne.s32.totalorder %s91, %s92
      %p104 = scmp.eq.s32.totalorder %s26, 1
      %p105 = por %p103, %p104
      %p107 = scmp.ne.s32.totalorder %s92, %s106
      %p108 = scmp.eq.s32.totalorder %s26, 0
      %p109 = por %p107, %p108
      %s110 = ssub.s32 %s27, %s39
      %s111 = ssub.s32 %s28, %s35
      %s112 = sor.u32 %s110, %s111
      %p113 = scmp.eq.s32.totalorder %s112, 0
      %s115 = sadd.s32 %s114, 1
      %s116 = scalar_select %p113, %s114, %s115
      %p119 = pneg %p113
      %p120 = scmp.eq.s32.totalorder %s20, 1
      %p121 = por %p119, %p120
      %p122 = scmp.ne.s32.totalorder %s114, %s117
      %p123 = scmp.eq.s32.totalorder %s20, 0
      %p124 = por %p122, %p123
      %p125 = scmp.ne.s32.totalorder %s114, %s117
      %p126 = scmp.eq.s32.totalorder %s25, 1
      %p127 = por %p125, %p126
      %p128 = scmp.ne.s32.totalorder %s117, %s118
      %p129 = scmp.eq.s32.totalorder %s25, 0
      %p130 = por %p128, %p129
      %p131 = scmp.ne.s32.totalorder %s117, %s118
      %p132 = scmp.eq.s32.totalorder %s26, 1
      %p133 = por %p131, %p132
      %p135 = scmp.ne.s32.totalorder %s118, %s134
      %p136 = scmp.eq.s32.totalorder %s26, 0
      %p137 = por %p135, %p136
      %s138 = ssub.s32 %s27, %s39
      %s139 = ssub.s32 %s28, %s35
      %s140 = sor.u32 %s138, %s139
      %p141 = scmp.eq.s32.totalorder %s140, 0
      %s143 = sadd.s32 %s142, 1
      %s144 = scalar_select %p141, %s142, %s143
      %p147 = pneg %p141
      %p148 = scmp.eq.s32.totalorder %s20, 1
      %p149 = por %p147, %p148
      %p150 = scmp.ne.s32.totalorder %s142, %s145
      %p151 = scmp.eq.s32.totalorder %s20, 0
      %p152 = por %p150, %p151
      %p153 = scmp.ne.s32.totalorder %s142, %s145
      %p154 = scmp.eq.s32.totalorder %s25, 1
      %p155 = por %p153, %p154
      %p156 = scmp.ne.s32.totalorder %s145, %s146
      %p157 = scmp.eq.s32.totalorder %s25, 0
      %p158 = por %p156, %p157
      %p159 = scmp.ne.s32.totalorder %s145, %s146
      %p160 = scmp.eq.s32.totalorder %s26, 1
      %p161 = por %p159, %p160
      %p163 = scmp.ne.s32.totalorder %s146, %s162
      %p164 = scmp.eq.s32.totalorder %s26, 0
      %p165 = por %p163, %p164
      %p166 = scmp.le.s32.totalorder 1, %s20
      %p167 = scmp.lt.s32.totalorder %s20, 3
      %p168 = pnand %p166, %p167
      %p169 = pneg %p168
      // Predicated region
      $region9: #{tpu_custom_call.1} parent=5 // pred_check
        _
      $region10: #{tpu_custom_call.1} parent=5 // pred_check_branch
        %171 = sbr.rel (%p168) target = $region12
      $region11: #{tpu_custom_call.1} parent=5 // pred_region
        %s172 = ssub.s32 %s20, 1
        // Predicated region
        $region13: #{tpu_custom_call.1} parent=11 // pred_check
          %p173 = pneg %p81
        $region14: #{tpu_custom_call.1} parent=11 // pred_check_branch
          %175 = sbr.rel (%p173) target = $region16
        $region15: #{tpu_custom_call.1} parent=11 // pred_region
          _
        $region16: #{tpu_custom_call.1} parent=11 // pred_fallthru
          _
        // Predicated region
        $region17: #{tpu_custom_call.1} parent=11 // pred_check
          %p176 = pneg %p102
        $region18: #{tpu_custom_call.1} parent=11 // pred_check_branch
          %178 = sbr.rel (%p176) target = $region20
        $region19: #{tpu_custom_call.1} parent=11 // pred_region
          _
        $region20: #{tpu_custom_call.1} parent=11 // pred_fallthru
          _
      $region12: #{tpu_custom_call.1} parent=5 // pred_fallthru
        _
      %p179 = scmp.lt.s32.totalorder %s20, 2
      // Predicated region
      $region21: #{tpu_custom_call.1} parent=5 // pred_check
        %p180 = pneg %p179
      $region22: #{tpu_custom_call.1} parent=5 // pred_check_branch
        %182 = sbr.rel (%p180) target = $region24
      $region23: #{tpu_custom_call.1} parent=5 // pred_region
        // Predicated region
        $region25: #{tpu_custom_call.1} parent=23 // pred_check
          %p183 = pneg %p54
        $region26: #{tpu_custom_call.1} parent=23 // pred_check_branch
          %185 = sbr.rel (%p183) target = $region28
        $region27: #{tpu_custom_call.1} parent=23 // pred_region
          %s186 = sand.u32 %s44, 1
          %s187 = scalar_lea.sflag [#allocation3], %s186
          %s188 = sand.u32 %s44, 1
          %s189 = smul.addr %s188, 64
          %s190 = scalar_lea.vmem [#allocation2], %s189
          %s191 = smul.u32 2, %s28
          %s193 = ssub.s32 1024, 1024
          %194 = vsyncadd %s187, %s193
          %s195 = smul.addr %s27, 8
          %s196 = sadd.s32 %s191, %s195
          %s197 = smul.addr %s196, 128
          %s198 = scalar_lea.hbm %s0, %s197
          %s199 = sshll.u32 %s190, 4
          %s200 = int_to_ptr.vmem [resolvable:$true] %s199
          %205 = dma.hbm_to_vmem [thread:$0]  %s198, 1024, %s200, %s187, 256, 256, 16
        $region28: #{tpu_custom_call.1} parent=23 // pred_fallthru
          _
      $region24: #{tpu_custom_call.1} parent=5 // pred_fallthru
        _
      %p206 = scmp.le.s32.totalorder 1, %s20
      %p207 = scmp.lt.s32.totalorder %s20, 3
      %p208 = pnand %p206, %p207
      %p209 = pneg %p208
      // Predicated region
      $region29: #{tpu_custom_call.1} parent=5 // pred_check
        _
      $region30: #{tpu_custom_call.1} parent=5 // pred_check_branch
        %211 = sbr.rel (%p208) target = $region32
      $region31: #{tpu_custom_call.1} parent=5 // pred_region
        %s212 = ssub.s32 %s20, 1
        %s213 = sand.u32 %s47, 1
        %s214 = scalar_lea.sflag [#allocation3], %s213
        %s215 = sand.u32 %s47, 1
        %s216 = smul.addr %s215, 64
        %s217 = scalar_lea.vmem [#allocation2], %s216
        // Predicated region
        $region33: #{tpu_custom_call.1} parent=31 // pred_check
          %p218 = pneg %p60
        $region34: #{tpu_custom_call.1} parent=31 // pred_check_branch
          %220 = sbr.rel (%p218) target = $region36
        $region35: #{tpu_custom_call.1} parent=31 // pred_region
          %221 = dma.done %s214, 1024
        $region36: #{tpu_custom_call.1} parent=31 // pred_fallthru
          _
        %s222 = sand.u32 %s47, 1
        %s223 = scalar_lea.sflag [#allocation3], %s222
        %s224 = sand.u32 %s47, 1
        %s225 = smul.addr %s224, 64
        %s226 = scalar_lea.vmem [#allocation2], %s225
        %p227 = pneg %p60
        %p228 = pneg %p57
        %p229 = pneg %p81
        %p230 = pneg %p78
        %p231 = pneg %p102
        %p232 = pneg %p99
        %p233 = pneg %p130
        %p234 = pneg %p127
        %s235 = sand.u32 %s117, 1
        %s236 = scalar_lea.sflag [#allocation4], %s235
        %s237 = sand.u32 %s117, 1
        %s238 = smul.addr %s237, 16
        %s239 = scalar_lea.vmem [#allocation5], %s238
        %p240 = pneg %p158
        %p241 = pneg %p155
        %s242 = sand.u32 %s145, 1
        %s243 = scalar_lea.sflag [#allocation7], %s242
        %s244 = sand.u32 %s145, 1
        %s245 = smul.addr %s244, 32
        %s246 = scalar_lea.vmem [#allocation6], %s245
        %s247 = smul.u32 2, %s30
        %s248 = smul.u32 2, %s30
        %s249 = smul.u32 2, %s30
        %v250 = vld [vmem:[%s217] sm:$0xff]
        %v251 = vld [vmem:[%s217 + $0x8] sm:$0xff]
        %v252 = vld [vmem:[%s217 + $0x10] sm:$0xff]
        %v253 = vld [vmem:[%s217 + $0x18] sm:$0xff]
        %v254 = vld [vmem:[%s217 + $0x20] sm:$0xff]
        %v255 = vld [vmem:[%s217 + $0x28] sm:$0xff]
        %v256 = vld [vmem:[%s217 + $0x30] sm:$0xff]
        %v257 = vld [vmem:[%s217 + $0x38] sm:$0xff]
        %v258 = vld [vmem:[%s1] sm:$0xff]
        %v259 = vld [vmem:[%s1 + $0x8] sm:$0xff]
        %v260 = vld [vmem:[%s1 + $0x10] sm:$0xff]
        %v261 = vld [vmem:[%s2] sm:$0xff]
        %v262 = vld [vmem:[%s2 + $0x8] sm:$0xff]
        %v263 = vld [vmem:[%s2 + $0x10] sm:$0xff]
        %265 = vset.pattern.permute.xlu0 0
        %266 = vperm.xlu0 %265, %v261
        %v267 = vpop.permute.xlu0 %266
        %270 = vset.pattern.permute.xlu0 0
        %271 = vperm.xlu0 %270, %v262
        %v272 = vpop.permute.xlu0 %271
        %275 = vset.pattern.permute.xlu0 0
        %276 = vperm.xlu0 %275, %v263
        %v277 = vpop.permute.xlu0 %276
        %vm279 = vcmask 261120
        %v281 = vsel %vm279, %v258, 0
        %v284 = vsel %vm279, %v259, 0
        %v287 = vsel %vm279, %v260, 0
        %289 = vmatprep.subr.mxu0 0.0
        %290 = vmatpush1.msra.mxu0 0.0
        %291 = vmatprep.subr.mxu0 0.0
        %292 = vmatpush1.msra.mxu0 0.0
        %293 = vmatprep.subr.mxu0 0.0
        %294 = vmatpush1.msra.mxu0 0.0
        %295 = vmatprep.subr.mxu0 0.0
        %296 = vmatpush1.msra.mxu0 0.0
        %297 = vmatprep.subr.mxu0 0.0
        %298 = vmatpush1.msra.mxu0 0.0
        %299 = vmatprep.subr.mxu0 0.0
        %300 = vmatpush1.msra.mxu0 0.0
        %301 = vmatprep.subr.mxu0 0.0
        %302 = vmatpush1.msra.mxu0 0.0
        %303 = vmatprep.subr.mxu0 0.0
        %304 = vmatpush1.msra.mxu0 0.0
        %305 = vmatprep.subr.mxu0 0.0
        %306 = vmatpush1.msra.mxu0 0.0
        %307 = vmatprep.subr.mxu0 0.0
        %308 = vmatpush1.msra.mxu0 0.0
        %309 = vmatprep.subr.mxu0 0.0
        %310 = vmatpush1.msra.mxu0 0.0
        %311 = vmatprep.subr.mxu0 0.0
        %312 = vmatpush1.msra.mxu0 0.0
        %313 = vmatprep.subr.mxu0 %v257
        %314 = vmatpush1.msra.mxu0 %v256
        %315 = vmatprep.subr.mxu0 %v255
        %316 = vmatpush1.msra.mxu0 %v254
        %317 = vmatprep.subr.mxu0 %v253
        %318 = vmatpush1.msra.mxu0 %v252
        %319 = vmatprep.subr.mxu0 %v251
        %320 = vmatpush1.msra.mxu0 %v250
        %321 = vmatprep.subr.mxu0 0.0
        %322 = vmatpush2.msra.mxu0 0.0
        %323 = vmatprep.subr.mxu0 0.0
        %324 = vmatpush2.msra.mxu0 0.0
        %325 = vmatprep.subr.mxu0 0.0
        %326 = vmatpush2.msra.mxu0 0.0
        %327 = vmatprep.subr.mxu0 0.0
        %328 = vmatpush2.msra.mxu0 0.0
        %329 = vmatprep.subr.mxu0 0.0
        %330 = vmatpush2.msra.mxu0 0.0
        %331 = vmatprep.subr.mxu0 0.0
        %332 = vmatpush2.msra.mxu0 0.0
        %333 = vmatprep.subr.mxu0 0.0
        %334 = vmatpush2.msra.mxu0 0.0
        %335 = vmatprep.subr.mxu0 0.0
        %336 = vmatpush2.msra.mxu0 0.0
        %337 = vmatprep.subr.mxu0 0.0
        %338 = vmatpush2.msra.mxu0 0.0
        %339 = vmatprep.subr.mxu0 0.0
        %340 = vmatpush2.msra.mxu0 0.0
        %341 = vmatprep.subr.mxu0 0.0
        %342 = vmatpush2.msra.mxu0 0.0
        %343 = vmatprep.subr.mxu0 0.0
        %344 = vmatpush2.msra.mxu0 0.0
        %345 = vmatprep.subr.mxu0 0.0
        %346 = vmatpush2.msra.mxu0 0.0
        %347 = vmatprep.subr.mxu0 0.0
        %348 = vmatpush2.msra.mxu0 0.0
        %349 = vmatprep.subr.mxu0 0.0
        %350 = vmatpush2.msra.mxu0 0.0
        %351 = vmatprep.subr.mxu0 0.0
        %352 = vmatpush2.msra.mxu0 0.0
        %353 = vmatprep.mubr.f32.mxu0 0.0
        %354 = vmatmul.mubr.f32.gmra.mxu0 %v281
        %v355 = vpop.f32.mrf.mxu0
        %v356 = vadd.f32 %v267, %v355
        %v357 = vpop.f32.mrf.mxu0
        %v358 = vadd.f32 %v267, %v357
        %359 = vmatprep.mubr.f32.mxu0 0.0
        %360 = vmatmul.mubr.f32.gmra.mxu0 %v284
        %v361 = vpop.f32.mrf.mxu0
        %v362 = vadd.f32 %v272, %v361
        %v363 = vpop.f32.mrf.mxu0
        %v364 = vadd.f32 %v272, %v363
        %365 = vmatprep.mubr.f32.mxu0 0.0
        %366 = vmatmul.mubr.f32.gmra.mxu0 %v287
        %v367 = vpop.f32.mrf.mxu0
        %v368 = vadd.f32 %v277, %v367
        %v369 = vpop.f32.mrf.mxu0
        %v370 = vadd.f32 %v277, %v369
        %371 = vdwg.mxu0
        %372 = vst [vmem:[%s239] sm:$0xff] %v356
        %373 = vst [vmem:[%s239 + $0x8] sm:$0xff] %v358
        %374 = vst [vmem:[%s246] sm:$0xff] %v362
        %375 = vst [vmem:[%s246 + $0x8] sm:$0xff] %v364
        %376 = vst [vmem:[%s246 + $0x10] sm:$0xff] %v368
        %377 = vst [vmem:[%s246 + $0x18] sm:$0xff] %v370
        %s378 = sand.u32 %s117, 1
        %s379 = scalar_lea.sflag [#allocation4], %s378
        %s380 = sand.u32 %s117, 1
        %s381 = smul.addr %s380, 16
        %s382 = scalar_lea.vmem [#allocation5], %s381
        %s383 = sand.u32 %s145, 1
        %s384 = scalar_lea.sflag [#allocation7], %s383
        %s385 = sand.u32 %s145, 1
        %s386 = smul.addr %s385, 32
        %s387 = scalar_lea.vmem [#allocation6], %s386
        // Predicated region
        $region37: #{tpu_custom_call.1} parent=31 // pred_check
          %p388 = pneg %p127
        $region38: #{tpu_custom_call.1} parent=31 // pred_check_branch
          %390 = sbr.rel (%p388) target = $region40
        $region39: #{tpu_custom_call.1} parent=31 // pred_region
          %s391 = smul.u32 2, %s30
          %s393 = ssub.s32 256, 256
          %394 = vsyncadd %s379, %s393
          %s395 = smul.addr %s29, 2
          %s396 = sadd.s32 %s391, %s395
          %s397 = smul.addr %s396, 128
          %s398 = scalar_lea.hbm %s3, %s397
          %s400 = sshll.u32 %s382, 4
          %s401 = int_to_ptr.vmem [resolvable:$true] %s400
          %403 = dma.vmem_to_hbm [thread:$0]  %s401, 256, %s398, %s379
        $region40: #{tpu_custom_call.1} parent=31 // pred_fallthru
          _
        // Predicated region
        $region41: #{tpu_custom_call.1} parent=31 // pred_check
          %p404 = pneg %p155
        $region42: #{tpu_custom_call.1} parent=31 // pred_check_branch
          %406 = sbr.rel (%p404) target = $region44
        $region43: #{tpu_custom_call.1} parent=31 // pred_region
          %s407 = smul.u32 2, %s30
          %s409 = ssub.s32 512, 512
          %410 = vsyncadd %s384, %s409
          %s411 = smul.addr %s29, 4
          %s412 = sadd.s32 %s407, %s411
          %s413 = smul.addr %s412, 128
          %s414 = scalar_lea.hbm %s4, %s413
          %s415 = sshll.u32 %s387, 4
          %s416 = int_to_ptr.vmem [resolvable:$true] %s415
          %421 = dma.vmem_to_hbm [thread:$0]  %s416, 512, %s414, %s384, 256, 256, 16
        $region44: #{tpu_custom_call.1} parent=31 // pred_fallthru
          _
      $region32: #{tpu_custom_call.1} parent=5 // pred_fallthru
        _
      %p422 = scmp.le.s32.totalorder 2, %s20
      // Predicated region
      $region45: #{tpu_custom_call.1} parent=5 // pred_check
        %p423 = pneg %p422
      $region46: #{tpu_custom_call.1} parent=5 // pred_check_branch
        %425 = sbr.rel (%p423) target = $region48
      $region47: #{tpu_custom_call.1} parent=5 // pred_region
        %s426 = ssub.s32 %s20, 2
        // Predicated region
        $region49: #{tpu_custom_call.1} parent=47 // pred_check
          %p427 = pneg %p133
        $region50: #{tpu_custom_call.1} parent=47 // pred_check_branch
          %429 = sbr.rel (%p427) target = $region52
        $region51: #{tpu_custom_call.1} parent=47 // pred_region
          %s430 = sand.u32 %s118, 1
          %s431 = scalar_lea.sflag [#allocation4], %s430
          %s432 = sand.u32 %s118, 1
          %s433 = smul.addr %s432, 16
          %s434 = scalar_lea.vmem [#allocation5], %s433
          %435 = dma.done %s431, 256
        $region52: #{tpu_custom_call.1} parent=47 // pred_fallthru
          _
        // Predicated region
        $region53: #{tpu_custom_call.1} parent=47 // pred_check
          %p436 = pneg %p161
        $region54: #{tpu_custom_call.1} parent=47 // pred_check_branch
          %438 = sbr.rel (%p436) target = $region56
        $region55: #{tpu_custom_call.1} parent=47 // pred_region
          %s439 = sand.u32 %s146, 1
          %s440 = scalar_lea.sflag [#allocation7], %s439
          %s441 = sand.u32 %s146, 1
          %s442 = smul.addr %s441, 32
          %s443 = scalar_lea.vmem [#allocation6], %s442
          %444 = dma.done %s440, 512
        $region56: #{tpu_custom_call.1} parent=47 // pred_fallthru
          _
      $region48: #{tpu_custom_call.1} parent=5 // pred_fallthru
        _
    $region6: #{tpu_custom_call.1} parent=1 // loop_footer
      %s24 = sadd.s32 1, %s20
    $region7: #{tpu_custom_call.1} parent=1 // loop_footer_branch
      %19 = sbr.rel target = $region3
    $region8: #{tpu_custom_call.1} parent=1 // loop_exit
      _
    %445 = vsyncpa [#allocation3], 1
    %s446 = scalar_lea.sflag [#allocation3], 1
    %447 = vsyncpa %s446, 1
    %448 = vsyncpa [#allocation4], 1
    %s449 = scalar_lea.sflag [#allocation4], 1
    %450 = vsyncpa %s449, 1
    %451 = vsyncpa [#allocation7], 1
    %s452 = scalar_lea.sflag [#allocation7], 1
    %453 = vsyncpa %s452, 1

</llo_original>
